<compile_context>
chip_gen: v5e
topology: v5e:2x2
jax: 0.10.0
libtpu: 0.0.40
codegen_flags: <defaults>
</compile_context>

<pallas_src>
import functools

import jax
import jax.numpy as jnp
from jax import lax
from jax.experimental import pallas as pl
from jax.experimental.pallas import tpu as pltpu

SMOOTH = 1.0   # BinaryDiceLoss defaults: smooth=1, p=2, reduction='mean'
LANE = 128


def _dice_kernel(pred_ref, tgt_ref, out_ref, num_acc, den_acc, *, ignore_index):
    # pred_ref: (1, C, T)  logits block (bf16/f32)
    # tgt_ref : (1, 1, T)  int32 label block
    # out_ref : (1, C, 1)  per-(n, c) dice loss, written once at the last HW tile
    # num_acc / den_acc: (C, 1) f32 VMEM accumulators (persist across HW tiles)
    t_idx = pl.program_id(1)

    @pl.when(t_idx == 0)
    def _init():
        num_acc[...] = jnp.zeros_like(num_acc)
        den_acc[...] = jnp.zeros_like(den_acc)

    logits = pred_ref[0].astype(jnp.float32)            # (C, T)
    labels = tgt_ref[0]                                  # (1, T) int32
    C, T = logits.shape

    # Numerically-stable softmax over the class (sublane) axis.  Reciprocal of the
    # (1, T) row goes to the EUP; the (C, T) work is just a broadcast multiply.
    mx = jnp.max(logits, axis=0, keepdims=True)          # (1, T)
    e = jnp.exp(logits - mx)                             # (C, T)
    inv = pl.reciprocal(jnp.sum(e, axis=0, keepdims=True), approx=False)
    sm = e * inv                                         # (C, T)

    cls = lax.broadcasted_iota(jnp.int32, (C, T), 0)
    onehot = (labels == cls).astype(jnp.float32)         # (C, T); ignored pixels -> 0
    valid = (labels != ignore_index).astype(jnp.float32)  # (1, T)

    # num = sum(p * t * mask)        with t * mask == onehot (label==c implies valid)
    # den = sum((p^2 + t^2) * mask)  with t^2 * mask == onehot (t in {0, 1})
    num_acc[...] += jnp.sum(sm * onehot, axis=1, keepdims=True)
    den_acc[...] += jnp.sum(sm * sm * valid + onehot, axis=1, keepdims=True)

    @pl.when(t_idx == pl.num_programs(1) - 1)
    def _finalize():
        num = 2.0 * num_acc[...] + SMOOTH                 # (C, 1)
        den = den_acc[...] + SMOOTH                       # (C, 1)
        out_ref[...] = (1.0 - num / den)[None]            # (1, C, 1)


def dice_loss(logits_nchw, target_nhw, *, ignore_index=-1, tile_hw=8192,
              transfer_dtype=jnp.bfloat16):
    """DiceLoss.forward (aux=False, weight=None) for NCHW logits + integer labels."""
    N, C, H, W = logits_nchw.shape
    hw = H * W

    # HW tile: multiple of 128 lanes, at most tile_hw; ragged tail padded below.
    tile = max(LANE, (min(tile_hw, hw) // LANE) * LANE)
    hw_pad = pl.cdiv(hw, tile) * tile
    num_tiles = hw_pad // tile

    pred = logits_nchw.reshape(N, C, hw)
    if transfer_dtype is not None:
        pred = pred.astype(transfer_dtype)                # halve HBM bytes; f32 math in-kernel
    tgt = target_nhw.reshape(N, 1, hw).astype(jnp.int32)
    if hw_pad != hw:
        pred = jnp.pad(pred, ((0, 0), (0, 0), (0, hw_pad - hw)))
        tgt = jnp.pad(tgt, ((0, 0), (0, 0), (0, hw_pad - hw)),
                      constant_values=ignore_index)       # padded pixels are masked out

    grid_spec = pltpu.PrefetchScalarGridSpec(
        num_scalar_prefetch=0,
        grid=(N, num_tiles),                              # reduction (HW) axis last
        in_specs=[
            pl.BlockSpec((1, C, tile), lambda n, t: (n, 0, t)),
            pl.BlockSpec((1, 1, tile), lambda n, t: (n, 0, t)),
        ],
        out_specs=pl.BlockSpec((1, C, 1), lambda n, t: (n, 0, 0)),
        scratch_shapes=[
            pltpu.VMEM((C, 1), jnp.float32),              # per-class numerator partials
            pltpu.VMEM((C, 1), jnp.float32),              # per-class denominator partials
        ],
    )

    loss_nc = pl.pallas_call(
        functools.partial(_dice_kernel, ignore_index=ignore_index),
        out_shape=jax.ShapeDtypeStruct((N, C, 1), jnp.float32),
        grid_spec=grid_spec,
        compiler_params=pltpu.CompilerParams(
            dimension_semantics=("parallel", "arbitrary"),  # batch across TCs (v7x)
            vmem_limit_bytes=32 * 1024 * 1024,
        ),
    )(pred, tgt)

    # BinaryDiceLoss(reduction='mean') -> mean over N per class; DiceLoss sums classes
    # then divides by C  ==  mean over (N, C).  N*C scalars: negligible wrapper work.
    return jnp.mean(loss_nc)


def dice_loss_reference(logits_nchw, target_nhw, ignore_index=-1):
    """Pure-JAX reference mirroring the PyTorch module semantics."""
    N, C, H, W = logits_nchw.shape
    valid = (target_nhw != ignore_index).astype(jnp.float32).reshape(N, -1)
    onehot = jax.nn.one_hot(jnp.maximum(target_nhw, 0), C, dtype=jnp.float32)
    sm = jax.nn.softmax(logits_nchw.astype(jnp.float32), axis=1)
    total = 0.0
    for i in range(C):
        p = sm[:, i].reshape(N, -1)
        t = onehot[..., i].reshape(N, -1)
        num = jnp.sum(p * t * valid, axis=1) * 2 + SMOOTH
        den = jnp.sum((p ** 2 + t ** 2) * valid, axis=1) + SMOOTH
        total = total + jnp.mean(1.0 - num / den)
    return total / C


if __name__ == "__main__":
    key = jax.random.PRNGKey(0)
    k_logits, k_target = jax.random.split(key)

    N, C, H, W = 2, 4, 16, 16
    logits = jax.random.normal(k_logits, (N, C, H, W), dtype=jnp.float32)
    # integer labels in [-1, C-1]; -1 is the ignore_index and exercises the valid mask
    target = jax.random.randint(k_target, (N, H, W), -1, C, dtype=jnp.int32)
    # make sure class C-1 is present so F.one_hot depth == C in the torch original
    target = target.at[0, 0, 0].set(C - 1)

    # tile_hw=128 -> 2 HW tiles, exercising the accumulate/finalize pipeline path
    loss = dice_loss(logits, target, tile_hw=128)
    loss = jax.block_until_ready(loss)

    # Exact check against a reference fed the same bf16-quantized logits the kernel sees
    logits_q = logits.astype(jnp.bfloat16).astype(jnp.float32)
    ref_q = dice_loss_reference(logits_q, target)
    assert jnp.allclose(loss, ref_q, atol=1e-4, rtol=1e-4), (loss, ref_q)

    # Loose check against the full-f32 reference (bf16 transfer error only)
    ref_f32 = dice_loss_reference(logits, target)
    assert jnp.allclose(loss, ref_f32, atol=2e-2, rtol=2e-2), (loss, ref_f32)

    print("KERNEL_OK")
</pallas_src>

<mosaic_0001>
module attributes {stable_mosaic.version = 11 : i64} {
  func.func @_dice_kernel(%arg0: i32, %arg1: i32, %arg2: memref<1x4x128xbf16, #tpu.memory_space<vmem>>, %arg3: memref<1x1x128xi32, #tpu.memory_space<vmem>>, %arg4: memref<1x4x1xf32, #tpu.memory_space<vmem>>, %arg5: memref<4x1xf32, #tpu.memory_space<vmem>>, %arg6: memref<4x1xf32, #tpu.memory_space<vmem>>) attributes {dimension_semantics = [#tpu.dimension_semantics<parallel>, #tpu.dimension_semantics<arbitrary>], iteration_bounds = array<i64: 2, 2>, scalar_prefetch = 0 : i64, scratch_operands = 2 : i64, tpu.core_type = #tpu.core_type<tc>, window_params = [{transform_indices = @transform_0, window_bounds = array<i64: 1, 4, 128>}, {transform_indices = @transform_1, window_bounds = array<i64: 1, 1, 128>}, {transform_indices = @transform_2, window_bounds = array<i64: 1, 4, 1>}]} {
    %c0_i32 = arith.constant 0 : i32
    %0 = arith.cmpi eq, %arg1, %c0_i32 : i32
    %1 = arith.extui %0 : i1 to i32
    %c0_i32_0 = arith.constant 0 : i32
    %2 = arith.cmpi ne, %1, %c0_i32_0 : i32
    scf.if %2 {
      %cst_18 = arith.constant 0.000000e+00 : f32
      %45 = vector.broadcast %cst_18 : f32 to vector<4x1xf32>
      %c0_19 = arith.constant 0 : index
      %c0_20 = arith.constant 0 : index
      %46 = vector.load %arg5[%c0_19, %c0_20] : memref<4x1xf32, #tpu.memory_space<vmem>>, vector<4x1xf32>
      tpu.vector_store %arg5[%c0_19, %c0_20], %45 {strides = array<i32>} : memref<4x1xf32, #tpu.memory_space<vmem>>, vector<4x1xf32>,
      %cst_21 = arith.constant 0.000000e+00 : f32
      %47 = vector.broadcast %cst_21 : f32 to vector<4x1xf32>
      %c0_22 = arith.constant 0 : index
      %c0_23 = arith.constant 0 : index
      %48 = vector.load %arg6[%c0_22, %c0_23] : memref<4x1xf32, #tpu.memory_space<vmem>>, vector<4x1xf32>
      tpu.vector_store %arg6[%c0_22, %c0_23], %47 {strides = array<i32>} : memref<4x1xf32, #tpu.memory_space<vmem>>, vector<4x1xf32>,
    } else {
    }
    %c0 = arith.constant 0 : index
    %c0_1 = arith.constant 0 : index
    %c0_2 = arith.constant 0 : index
    %3 = vector.load %arg2[%c0, %c0_1, %c0_2] : memref<1x4x128xbf16, #tpu.memory_space<vmem>>, vector<1x4x128xbf16>
    %4 = vector.shape_cast %3 : vector<1x4x128xbf16> to vector<4x128xbf16>
    %5 = arith.extf %4 : vector<4x128xbf16> to vector<4x128xf32>
    %c0_3 = arith.constant 0 : index
    %c0_4 = arith.constant 0 : index
    %c0_5 = arith.constant 0 : index
    %6 = vector.load %arg3[%c0_3, %c0_4, %c0_5] : memref<1x1x128xi32, #tpu.memory_space<vmem>>, vector<1x1x128xi32>
    %7 = vector.shape_cast %6 : vector<1x1x128xi32> to vector<1x128xi32>
    %cst = arith.constant dense<0xFF800000> : vector<128xf32>
    %8 = vector.multi_reduction <maximumf>, %5, %cst [0] : vector<4x128xf32> to vector<128xf32>
    %9 = vector.shape_cast %8 : vector<128xf32> to vector<1x128xf32>
    %10 = vector.broadcast %9 : vector<1x128xf32> to vector<4x128xf32>
    %11 = arith.subf %5, %10 : vector<4x128xf32>
    %12 = math.exp %11 : vector<4x128xf32>
    %cst_6 = arith.constant dense<0.000000e+00> : vector<128xf32>
    %13 = vector.multi_reduction <add>, %12, %cst_6 [0] : vector<4x128xf32> to vector<128xf32>
    %14 = vector.shape_cast %13 : vector<128xf32> to vector<1x128xf32>
    %15 = tpu.reciprocal %14 : vector<1x128xf32> -> vector<1x128xf32>
    %16 = vector.broadcast %15 : vector<1x128xf32> to vector<4x128xf32>
    %17 = arith.mulf %12, %16 : vector<4x128xf32>
    %18 = tpu.iota {dimensions = array<i32: 0>} : vector<4x128xi32>
    %19 = vector.broadcast %7 : vector<1x128xi32> to vector<4x128xi32>
    %20 = arith.cmpi eq, %19, %18 : vector<4x128xi32>
    %21 = arith.extui %20 : vector<4x128xi1> to vector<4x128xi32>
    %22 = arith.sitofp %21 : vector<4x128xi32> to vector<4x128xf32>
    %c-1_i32 = arith.constant -1 : i32
    %23 = vector.broadcast %c-1_i32 : i32 to vector<1x128xi32>
    %24 = arith.cmpi ne, %7, %23 : vector<1x128xi32>
    %25 = arith.extui %24 : vector<1x128xi1> to vector<1x128xi32>
    %26 = arith.sitofp %25 : vector<1x128xi32> to vector<1x128xf32>
    %c0_7 = arith.constant 0 : index
    %c0_8 = arith.constant 0 : index
    %27 = vector.load %arg5[%c0_7, %c0_8] : memref<4x1xf32, #tpu.memory_space<vmem>>, vector<4x1xf32>
    %28 = arith.mulf %17, %22 : vector<4x128xf32>
    %cst_9 = arith.constant dense<0.000000e+00> : vector<4xf32>
    %29 = vector.multi_reduction <add>, %28, %cst_9 [1] : vector<4x128xf32> to vector<4xf32>
    %30 = vector.shape_cast %29 : vector<4xf32> to vector<4x1xf32>
    %31 = arith.addf %27, %30 : vector<4x1xf32>
    %c0_10 = arith.constant 0 : index
    %c0_11 = arith.constant 0 : index
    %32 = vector.load %arg5[%c0_10, %c0_11] : memref<4x1xf32, #tpu.memory_space<vmem>>, vector<4x1xf32>
    tpu.vector_store %arg5[%c0_10, %c0_11], %31 {strides = array<i32>} : memref<4x1xf32, #tpu.memory_space<vmem>>, vector<4x1xf32>,
    %c0_12 = arith.constant 0 : index
    %c0_13 = arith.constant 0 : index
    %33 = vector.load %arg6[%c0_12, %c0_13] : memref<4x1xf32, #tpu.memory_space<vmem>>, vector<4x1xf32>
    %34 = arith.mulf %17, %17 : vector<4x128xf32>
    %35 = vector.broadcast %26 : vector<1x128xf32> to vector<4x128xf32>
    %36 = arith.mulf %34, %35 : vector<4x128xf32>
    %37 = arith.addf %36, %22 : vector<4x128xf32>
    %cst_14 = arith.constant dense<0.000000e+00> : vector<4xf32>
    %38 = vector.multi_reduction <add>, %37, %cst_14 [1] : vector<4x128xf32> to vector<4xf32>
    %39 = vector.shape_cast %38 : vector<4xf32> to vector<4x1xf32>
    %40 = arith.addf %33, %39 : vector<4x1xf32>
    %c0_15 = arith.constant 0 : index
    %c0_16 = arith.constant 0 : index
    %41 = vector.load %arg6[%c0_15, %c0_16] : memref<4x1xf32, #tpu.memory_space<vmem>>, vector<4x1xf32>
    tpu.vector_store %arg6[%c0_15, %c0_16], %40 {strides = array<i32>} : memref<4x1xf32, #tpu.memory_space<vmem>>, vector<4x1xf32>,
    %c1_i32 = arith.constant 1 : i32
    %42 = arith.cmpi eq, %arg1, %c1_i32 : i32
    %43 = arith.extui %42 : i1 to i32
    %c0_i32_17 = arith.constant 0 : i32
    %44 = arith.cmpi ne, %43, %c0_i32_17 : i32
    scf.if %44 {
      %c0_18 = arith.constant 0 : index
      %c0_19 = arith.constant 0 : index
      %45 = vector.load %arg5[%c0_18, %c0_19] : memref<4x1xf32, #tpu.memory_space<vmem>>, vector<4x1xf32>
      %cst_20 = arith.constant 2.000000e+00 : f32
      %46 = vector.broadcast %cst_20 : f32 to vector<4x1xf32>
      %47 = arith.mulf %46, %45 : vector<4x1xf32>
      %cst_21 = arith.constant 1.000000e+00 : f32
      %48 = vector.broadcast %cst_21 : f32 to vector<4x1xf32>
      %49 = arith.addf %47, %48 : vector<4x1xf32>
      %c0_22 = arith.constant 0 : index
      %c0_23 = arith.constant 0 : index
      %50 = vector.load %arg6[%c0_22, %c0_23] : memref<4x1xf32, #tpu.memory_space<vmem>>, vector<4x1xf32>
      %cst_24 = arith.constant 1.000000e+00 : f32
      %51 = vector.broadcast %cst_24 : f32 to vector<4x1xf32>
      %52 = arith.addf %50, %51 : vector<4x1xf32>
      %53 = arith.divf %49, %52 : vector<4x1xf32>
      %cst_25 = arith.constant 1.000000e+00 : f32
      %54 = vector.broadcast %cst_25 : f32 to vector<4x1xf32>
      %55 = arith.subf %54, %53 : vector<4x1xf32>
      %56 = vector.shape_cast %55 : vector<4x1xf32> to vector<1x4x1xf32>
      %c0_26 = arith.constant 0 : index
      %c0_27 = arith.constant 0 : index
      %c0_28 = arith.constant 0 : index
      %57 = vector.load %arg4[%c0_26, %c0_27, %c0_28] : memref<1x4x1xf32, #tpu.memory_space<vmem>>, vector<1x4x1xf32>
      tpu.vector_store %arg4[%c0_26, %c0_27, %c0_28], %56 {strides = array<i32>} : memref<1x4x1xf32, #tpu.memory_space<vmem>>, vector<1x4x1xf32>,
    } else {
    }
    return
  }
  func.func @transform_0(%arg0: i32, %arg1: i32) -> (i32, i32, i32) {
    %c0_i32 = arith.constant 0 : i32
    %c0_i32_0 = arith.constant 0 : i32
    return %arg0, %c0_i32, %arg1 : i32, i32, i32
  }
  func.func @transform_1(%arg0: i32, %arg1: i32) -> (i32, i32, i32) {
    %c0_i32 = arith.constant 0 : i32
    %c0_i32_0 = arith.constant 0 : i32
    return %arg0, %c0_i32, %arg1 : i32, i32, i32
  }
  func.func @transform_2(%arg0: i32, %arg1: i32) -> (i32, i32, i32) {
    %c0_i32 = arith.constant 0 : i32
    %c0_i32_0 = arith.constant 0 : i32
    %c0_i32_1 = arith.constant 0 : i32
    return %arg0, %c0_i32, %c0_i32_0 : i32, i32, i32
  }
}

</mosaic_0001>

<llo_original>
// kernel: tpu_custom_call.1
$region0: #{tpu_custom_call.1}
  #allocation0 [shape = 'u32[]', space=smem, size = 0x4, offset = 0x4, fixed_abs, tag = 'smem constant byte address 0x4 - core index']
  #allocation1 [shape = 'u32[72,128]{1,0:T(1,128)}', space=vmem, size = 0x9000, scoped, tag = 'internal scratch']
  #allocation2 [shape = 'f32[4,1]{1,0:T(4,128)}', space=vmem, size = 0x800, scoped, tag = 'scratch operand']
  #allocation3 [shape = 'f32[4,1]{1,0:T(4,128)}', space=vmem, size = 0x800, scoped, tag = 'scratch operand']
  %s0 = inlined_call_operand.hbm [shape: bf16[2,4,256], index: 0, kind: input, shape index: {}]
  %s1 = inlined_call_operand.hbm [shape: s32[2,1,256], index: 1, kind: input, shape index: {}]
  %s2 = inlined_call_operand.vmem [shape: f32[2,4,1], index: 2, kind: output, shape index: {}]
  %s3 = sld [smem:[#allocation0]]
  $region57: #{tpu_custom_call.1} parent=0
    _
  %s5 = ssub.s32 1, %s3
  %s6 = scalar_select 0, %s5, %s3
  $region1: #{tpu_custom_call.1} parent=0
    #allocation4 [shape = 'u8[2048]{0}', space=vmem, size = 0x800, scoped, tag = 'input window, operand 0']
    #allocation5 [shape = 's32[2]{0}', space=sflag, size = 0x8, scoped, tag = 'scoped memory for tpu_custom_call.1']
    #allocation6 [shape = 'u8[1024]{0}', space=vmem, size = 0x400, scoped, tag = 'input window, operand 1']
    #allocation7 [shape = 's32[2]{0}', space=sflag, size = 0x8, scoped, tag = 'scoped memory for tpu_custom_call.1']
    %7 = vsyncpa [#allocation5], 0
    %s8 = scalar_lea.sflag [#allocation5], 1
    %9 = vsyncpa %s8, 0
    %10 = vsyncpa [#allocation7], 0
    %s11 = scalar_lea.sflag [#allocation7], 1
    %12 = vsyncpa %s11, 0
    loop: start=0, step=1, limit=6
    $region2: #{tpu_custom_call.1} parent=1 // loop_pre_header
      _
    $region3: #{tpu_custom_call.1} parent=1 // loop_header
      %s14 = sphi 0, %s18
      %p15 = scmp.ge.s32.totalorder %s14, 6
      %s21 = sphi 0, %s33
      %s22 = sphi 0, %s29
      %s23 = sphi 0, %s21
      %s24 = sphi 0, %s22
      %s25 = sphi 0, %s23
      %s26 = sphi 0, %s24
      %s38 = sphi 0, %s40
      %s41 = sphi 0, %s38
      %s42 = sphi 0, %s41
      %s58 = sphi 0, %s42
      %s66 = sphi 0, %s68
      %s69 = sphi 0, %s66
      %s70 = sphi 0, %s69
      %s86 = sphi 0, %s70
      %s92 = sphi 0, %s94
      %s95 = sphi 0, %s92
      %s96 = sphi 0, %s95
      %s112 = sphi 0, %s96
    $region4: #{tpu_custom_call.1} parent=1 // loop_header_branch
      %17 = sbr.rel (%p15) target = $region8
    $region5: #{tpu_custom_call.1} parent=1 // loop_body
      %s19 = ssub.s32 %s14, 1
      %s20 = ssub.s32 %s14, 2
      %s27 = sadd.s32 1, %s22
      %p28 = scmp.ge.s32.totalorder %s27, 2
      %s29 = scalar_select %p28, 0, %s27
      %s30 = sadd.s32 1, %s21
      %s31 = scalar_select %p28, %s30, %s21
      %p32 = scmp.ge.s32.totalorder %s31, 2
      %s33 = scalar_select %p32, 0, %s31
      %s34 = ssub.s32 %s21, %s33
      %s35 = ssub.s32 %s22, %s29
      %s36 = sor.u32 %s34, %s35
      %p37 = scmp.eq.s32.totalorder %s36, 0
      %s39 = sadd.s32 %s38, 1
      %s40 = scalar_select %p37, %s38, %s39
      %p43 = pneg %p37
      %p44 = scmp.eq.s32.totalorder %s14, 3
      %p45 = por %p43, %p44
      %p46 = scmp.ne.s32.totalorder %s38, %s41
      %p47 = scmp.eq.s32.totalorder %s14, 0
      %p48 = por %p46, %p47
      %p49 = scmp.ne.s32.totalorder %s38, %s41
      %p50 = scmp.eq.s32.totalorder %s19, 3
      %p51 = por %p49, %p50
      %p52 = scmp.ne.s32.totalorder %s41, %s42
      %p53 = scmp.eq.s32.totalorder %s19, 0
      %p54 = por %p52, %p53
      %p55 = scmp.ne.s32.totalorder %s41, %s42
      %p56 = scmp.eq.s32.totalorder %s20, 3
      %p57 = por %p55, %p56
      %p59 = scmp.ne.s32.totalorder %s42, %s58
      %p60 = scmp.eq.s32.totalorder %s20, 0
      %p61 = por %p59, %p60
      %s62 = ssub.s32 %s21, %s33
      %s63 = ssub.s32 %s22, %s29
      %s64 = sor.u32 %s62, %s63
      %p65 = scmp.eq.s32.totalorder %s64, 0
      %s67 = sadd.s32 %s66, 1
      %s68 = scalar_select %p65, %s66, %s67
      %p71 = pneg %p65
      %p72 = scmp.eq.s32.totalorder %s14, 3
      %p73 = por %p71, %p72
      %p74 = scmp.ne.s32.totalorder %s66, %s69
      %p75 = scmp.eq.s32.totalorder %s14, 0
      %p76 = por %p74, %p75
      %p77 = scmp.ne.s32.totalorder %s66, %s69
      %p78 = scmp.eq.s32.totalorder %s19, 3
      %p79 = por %p77, %p78
      %p80 = scmp.ne.s32.totalorder %s69, %s70
      %p81 = scmp.eq.s32.totalorder %s19, 0
      %p82 = por %p80, %p81
      %p83 = scmp.ne.s32.totalorder %s69, %s70
      %p84 = scmp.eq.s32.totalorder %s20, 3
      %p85 = por %p83, %p84
      %p87 = scmp.ne.s32.totalorder %s70, %s86
      %p88 = scmp.eq.s32.totalorder %s20, 0
      %p89 = por %p87, %p88
      %s90 = ssub.s32 %s21, %s33
      %p91 = scmp.eq.s32.totalorder %s90, 0
      %s93 = sadd.s32 %s92, 1
      %s94 = scalar_select %p91, %s92, %s93
      %p97 = pneg %p91
      %p98 = scmp.eq.s32.totalorder %s14, 3
      %p99 = por %p97, %p98
      %p100 = scmp.ne.s32.totalorder %s92, %s95
      %p101 = scmp.eq.s32.totalorder %s14, 0
      %p102 = por %p100, %p101
      %p103 = scmp.ne.s32.totalorder %s92, %s95
      %p104 = scmp.eq.s32.totalorder %s19, 3
      %p105 = por %p103, %p104
      %p106 = scmp.ne.s32.totalorder %s95, %s96
      %p107 = scmp.eq.s32.totalorder %s19, 0
      %p108 = por %p106, %p107
      %p109 = scmp.ne.s32.totalorder %s95, %s96
      %p110 = scmp.eq.s32.totalorder %s20, 3
      %p111 = por %p109, %p110
      %p113 = scmp.ne.s32.totalorder %s96, %s112
      %p114 = scmp.eq.s32.totalorder %s20, 0
      %p115 = por %p113, %p114
      %p116 = scmp.le.s32.totalorder 1, %s14
      %p117 = scmp.lt.s32.totalorder %s14, 5
      %p118 = pnand %p116, %p117
      %p119 = pneg %p118
      // Predicated region
      $region9: #{tpu_custom_call.1} parent=5 // pred_check
        _
      $region10: #{tpu_custom_call.1} parent=5 // pred_check_branch
        %121 = sbr.rel (%p118) target = $region12
      $region11: #{tpu_custom_call.1} parent=5 // pred_region
        %s122 = ssub.s32 %s14, 1
      $region12: #{tpu_custom_call.1} parent=5 // pred_fallthru
        _
      %p123 = scmp.lt.s32.totalorder %s14, 4
      // Predicated region
      $region13: #{tpu_custom_call.1} parent=5 // pred_check
        %p124 = pneg %p123
      $region14: #{tpu_custom_call.1} parent=5 // pred_check_branch
        %126 = sbr.rel (%p124) target = $region16
      $region15: #{tpu_custom_call.1} parent=5 // pred_region
        // Predicated region
        $region17: #{tpu_custom_call.1} parent=15 // pred_check
          %p127 = pneg %p48
        $region18: #{tpu_custom_call.1} parent=15 // pred_check_branch
          %129 = sbr.rel (%p127) target = $region20
        $region19: #{tpu_custom_call.1} parent=15 // pred_region
          %s130 = sand.u32 %s38, 1
          %s131 = scalar_lea.sflag [#allocation5], %s130
          %s132 = sand.u32 %s38, 1
          %s133 = smul.addr %s132, 2
          %s134 = scalar_lea.vmem [#allocation4], %s133
          %136 = vsyncadd %s131, 0
          %s137 = smul.addr %s21, 2
          %s138 = sadd.s32 %s22, %s137
          %s139 = smul.addr %s138, 2
          %s140 = scalar_lea.hbm %s0, %s139
          %s142 = sshll.u32 %s140, 4
          %s143 = int_to_ptr.hbm [resolvable:$true] %s142
          %s144 = sshll.u32 %s134, 4
          %s145 = int_to_ptr.vmem [resolvable:$true] %s144
          %147 = dma.hbm_to_vmem [thread:$0]  %s143, 32, %s145, %s131
        $region20: #{tpu_custom_call.1} parent=15 // pred_fallthru
          _
        // Predicated region
        $region21: #{tpu_custom_call.1} parent=15 // pred_check
          %p148 = pneg %p76
        $region22: #{tpu_custom_call.1} parent=15 // pred_check_branch
          %150 = sbr.rel (%p148) target = $region24
        $region23: #{tpu_custom_call.1} parent=15 // pred_region
          %s151 = sand.u32 %s66, 1
          %s152 = scalar_lea.sflag [#allocation7], %s151
          %s153 = sand.u32 %s66, 1
          %s154 = scalar_lea.vmem [#allocation6], %s153
          %156 = vsyncadd %s152, 0
          %s157 = smul.addr %s21, 2
          %s158 = sadd.s32 %s22, %s157
          %s159 = scalar_lea.hbm %s1, %s158
          %s161 = sshll.u32 %s159, 4
          %s162 = int_to_ptr.hbm [resolvable:$true] %s161
          %s163 = sshll.u32 %s154, 4
          %s164 = int_to_ptr.vmem [resolvable:$true] %s163
          %166 = dma.hbm_to_vmem [thread:$0]  %s162, 16, %s164, %s152
        $region24: #{tpu_custom_call.1} parent=15 // pred_fallthru
          _
      $region16: #{tpu_custom_call.1} parent=5 // pred_fallthru
        _
      %p167 = scmp.le.s32.totalorder 1, %s14
      %p168 = scmp.lt.s32.totalorder %s14, 5
      %p169 = pnand %p167, %p168
      %p170 = pneg %p169
      // Predicated region
      $region25: #{tpu_custom_call.1} parent=5 // pred_check
        _
      $region26: #{tpu_custom_call.1} parent=5 // pred_check_branch
        %172 = sbr.rel (%p169) target = $region28
      $region27: #{tpu_custom_call.1} parent=5 // pred_region
        %s173 = ssub.s32 %s14, 1
        %s174 = sand.u32 %s41, 1
        %s175 = scalar_lea.sflag [#allocation5], %s174
        %s176 = sand.u32 %s41, 1
        %s177 = smul.addr %s176, 2
        %s178 = scalar_lea.vmem [#allocation4], %s177
        // Predicated region
        $region29: #{tpu_custom_call.1} parent=27 // pred_check
          %p179 = pneg %p54
        $region30: #{tpu_custom_call.1} parent=27 // pred_check_branch
          %181 = sbr.rel (%p179) target = $region32
        $region31: #{tpu_custom_call.1} parent=27 // pred_region
          %183 = dma.done %s175, 32
        $region32: #{tpu_custom_call.1} parent=27 // pred_fallthru
          _
        %s184 = sand.u32 %s69, 1
        %s185 = scalar_lea.sflag [#allocation7], %s184
        %s186 = sand.u32 %s69, 1
        %s187 = scalar_lea.vmem [#allocation6], %s186
        // Predicated region
        $region33: #{tpu_custom_call.1} parent=27 // pred_check
          %p188 = pneg %p82
        $region34: #{tpu_custom_call.1} parent=27 // pred_check_branch
          %190 = sbr.rel (%p188) target = $region36
        $region35: #{tpu_custom_call.1} parent=27 // pred_region
          %192 = dma.done %s185, 16
        $region36: #{tpu_custom_call.1} parent=27 // pred_fallthru
          _
        %s193 = sand.u32 %s41, 1
        %s194 = scalar_lea.sflag [#allocation5], %s193
        %s195 = sand.u32 %s41, 1
        %s196 = smul.addr %s195, 2
        %s197 = scalar_lea.vmem [#allocation4], %s196
        %p198 = pneg %p54
        %p199 = pneg %p51
        %s200 = sand.u32 %s69, 1
        %s201 = scalar_lea.sflag [#allocation7], %s200
        %s202 = sand.u32 %s69, 1
        %s203 = scalar_lea.vmem [#allocation6], %s202
        %p204 = pneg %p82
        %p205 = pneg %p79
        %p206 = pneg %p108
        %p207 = pneg %p105
        %p208 = scmp.lt.s32.totalorder %s23, 1
        %s209 = scalar_select %p208, %s23, 1
        %s210 = smul.addr %s209, 4
        %s211 = scalar_lea.vmem %s2, %s210
        %p212 = scmp.lt.s32.totalorder %s23, 1
        %s213 = scalar_select %p212, %s23, 1
        %s214 = smul.addr %s213, 4
        %s215 = scalar_lea.vmem %s2, %s214
        %p216 = scmp.eq.s32.totalorder %s24, 0
        // Predicated region
        $region37: #{tpu_custom_call.1} parent=27 // pred_check
          %p217 = pneg %p216
        $region38: #{tpu_custom_call.1} parent=27 // pred_check_branch
          %219 = sbr.rel (%p217) target = $region40
        $region39: #{tpu_custom_call.1} parent=27 // pred_region
          %vm220 = vcmask 3072
          %221 = vst.msk [vmem:[#allocation2] sm:$0xf] %vm220, 0.0
          %222 = vst.msk [vmem:[#allocation3] sm:$0xf] %vm220, 0.0
        $region40: #{tpu_custom_call.1} parent=27 // pred_fallthru
          _
        %v223 = vld [vmem:[%s178] sm:$0x3]
        %v224 = vunpack.c.l.bf16 %v223
        %v225 = vld [vmem:[%s187] sm:$0x1]
        %vm226 = vcmask 1043456
        %v227 = vsel %vm226, %v224, -inf
        %v228 = vrot.slane %v227, 4
        %v229 = vmax.f32 %v227, %v228
        %v230 = vrot.slane %v229, 2
        %v231 = vmax.f32 %v229, %v230
        %v232 = vrot.slane %v231, 1
        %v233 = vmax.f32 %v231, %v232
        %v234 = vsub.f32 %v224, %v233
        %v235 = vmul.f32 %v234, 1.442695
        %v236 = vpow.pop %v235
        %v237 = vsel %vm226, %v236, 0.0
        %v238 = vrot.slane %v237, 4
        %v239 = vadd.f32 %v237, %v238
        %v240 = vrot.slane %v239, 2
        %v241 = vadd.f32 %v239, %v240
        %v242 = vrot.slane %v241, 1
        %v243 = vadd.f32 %v241, %v242
        %v244 = vrcp.pop %v243
        %v245 = vmul.f32 %v243, %v244
        %v246 = vsub.f32 1.0, %v245
        %v247 = vmul.f32 %v244, %v246
        %v248 = vadd.f32 %v244, %v247
        %vm249 = vweird.f32 %v243
        %vm250 = vweird.f32 %v244
        %vm251 = vmor %vm249, %vm250
        %v252 = vsel %vm251, %v244, %v248
        %v253 = vand.u32 2147483647, %v243
        %vm254 = vcmp.eq.f32.partialorder %v253, 8.507059e+37
        %v255 = vand.u32 %v243, 2147483648
        %v256 = vor.u32 1.1754944e-38, %v255
        %v257 = vsel %vm254, %v256, %v252
        %v258 = vmul.f32 %v236, %v257
        %v259 = vlaneseq
        %v260 = vshrl.u32 %v259, 7
        %v261 = vperm.slane %v225, 0
        %vm262 = vcmp.eq.s32.totalorder %v261, %v260
        %v263 = vsel %vm262, 1, 0
        %v264 = vcvt.s32.f32 %v263
        %vm265 = vcmp.ne.s32.totalorder %v225, 4294967295
        %v266 = vsel %vm265, 1, 0
        %v267 = vcvt.s32.f32 %v266
        %v268 = vld [vmem:[#allocation2] sm:$0xf]
        %v269 = vmul.f32 %v258, %v264
        %v270 = vsel %vm226, %v269, 0.0
        %271 = vadd.xlane.f32.xlu0 %v270
        %v272 = vpop.xlane.xlu0 %271
        %v273 = vadd.f32 %v268, %v272
        %vm274 = vcmask 3072
        %275 = vst.msk [vmem:[#allocation2] sm:$0xf] %vm274, %v273
        %v276 = vld [vmem:[#allocation3] sm:$0xf]
        %v277 = vmul.f32 %v258, %v258
        %v279 = vperm.slane %v267, 0
        %v281 = vmul.f32 %v277, %v279
        %v282 = vadd.f32 %v281, %v264
        %v283 = vsel %vm226, %v282, 0.0
        %284 = vadd.xlane.f32.xlu0 %v283
        %v285 = vpop.xlane.xlu0 %284
        %v286 = vadd.f32 %v276, %v285
        %287 = vst.msk [vmem:[#allocation3] sm:$0xf] %vm274, %v286
        %p288 = scmp.eq.s32.totalorder %s24, 1
        // Predicated region
        $region41: #{tpu_custom_call.1} parent=27 // pred_check
          %p289 = pneg %p288
        $region42: #{tpu_custom_call.1} parent=27 // pred_check_branch
          %291 = sbr.rel (%p289) target = $region44
        $region43: #{tpu_custom_call.1} parent=27 // pred_region
          %v292 = vld [vmem:[#allocation2] sm:$0xf]
          %v293 = vmul.f32 %v292, 2.0
          %v294 = vadd.f32 %v293, 1.0
          %v295 = vld [vmem:[#allocation3] sm:$0xf]
          %v296 = vadd.f32 %v295, 1.0
          %v297 = vrcp.pop %v296
          %v298 = vmul.f32 %v296, %v297
          %v299 = vsub.f32 1.0, %v298
          %v300 = vmul.f32 %v297, %v299
          %v301 = vadd.f32 %v297, %v300
          %vm302 = vweird.f32 %v296
          %vm303 = vweird.f32 %v297
          %vm304 = vmor %vm302, %vm303
          %v305 = vsel %vm304, %v297, %v301
          %v306 = vand.u32 2147483647, %v296
          %vm307 = vcmp.eq.f32.partialorder %v306, 8.507059e+37
          %v308 = vand.u32 %v296, 2147483648
          %v309 = vor.u32 1.1754944e-38, %v308
          %v310 = vsel %vm307, %v309, %v305
          %v311 = vmul.f32 %v294, %v310
          %v312 = vsub.f32 1.0, %v311
          %313 = vst.msk [vmem:[%s215] sm:$0xf] %vm274, %v312
        $region44: #{tpu_custom_call.1} parent=27 // pred_fallthru
          _
        %p314 = scmp.lt.s32.totalorder %s23, 1
        %s315 = scalar_select %p314, %s23, 1
        %s316 = smul.addr %s315, 4
        %s317 = scalar_lea.vmem %s2, %s316
        // Predicated region
        $region45: #{tpu_custom_call.1} parent=27 // pred_check
          %p318 = pneg %p105
        $region46: #{tpu_custom_call.1} parent=27 // pred_check_branch
          %320 = sbr.rel (%p318) target = $region48
        $region47: #{tpu_custom_call.1} parent=27 // pred_region
          _
        $region48: #{tpu_custom_call.1} parent=27 // pred_fallthru
          _
      $region28: #{tpu_custom_call.1} parent=5 // pred_fallthru
        _
      %p321 = scmp.le.s32.totalorder 2, %s14
      // Predicated region
      $region49: #{tpu_custom_call.1} parent=5 // pred_check
        %p322 = pneg %p321
      $region50: #{tpu_custom_call.1} parent=5 // pred_check_branch
        %324 = sbr.rel (%p322) target = $region52
      $region51: #{tpu_custom_call.1} parent=5 // pred_region
        %s325 = ssub.s32 %s14, 2
        // Predicated region
        $region53: #{tpu_custom_call.1} parent=51 // pred_check
          %p326 = pneg %p111
        $region54: #{tpu_custom_call.1} parent=51 // pred_check_branch
          %328 = sbr.rel (%p326) target = $region56
        $region55: #{tpu_custom_call.1} parent=51 // pred_region
          %p329 = scmp.lt.s32.totalorder %s25, 1
          %s330 = scalar_select %p329, %s25, 1
          %s331 = smul.addr %s330, 4
          %s332 = scalar_lea.vmem %s2, %s331
        $region56: #{tpu_custom_call.1} parent=51 // pred_fallthru
          _
      $region52: #{tpu_custom_call.1} parent=5 // pred_fallthru
        _
    $region6: #{tpu_custom_call.1} parent=1 // loop_footer
      %s18 = sadd.s32 1, %s14
    $region7: #{tpu_custom_call.1} parent=1 // loop_footer_branch
      %13 = sbr.rel target = $region3
    $region8: #{tpu_custom_call.1} parent=1 // loop_exit
      _
    %333 = vsyncpa [#allocation5], 1
    %s334 = scalar_lea.sflag [#allocation5], 1
    %335 = vsyncpa %s334, 1
    %336 = vsyncpa [#allocation7], 1
    %s337 = scalar_lea.sflag [#allocation7], 1
    %338 = vsyncpa %s337, 1

</llo_original>
